<compile_context>
chip_gen: v5e
topology: v5e:2x2
jax: 0.10.0
libtpu: 0.0.40
codegen_flags: <defaults>
</compile_context>

<pallas_src>
import math

import jax
import jax.numpy as jnp
from jax.experimental import pallas as pl
from jax.experimental.pallas import tpu as pltpu


def _vmem_capacity_bytes():
    """Best-effort per-core VMEM query; fallback is safe for every generation (v7x=64 MiB)."""
    try:
        return int(pltpu.get_tpu_info().vmem_capacity_bytes)
    except Exception:
        return 64 << 20


def _round_up(x, m):
    return -(-x // m) * m


def _pick_batch_tile(B, C, X, elem_bytes, hidden=0, user_rows=1):
    """VMEM-budgeted batch tile.  Returns (TB, vmem_limit_bytes)."""
    limit = min(_vmem_capacity_bytes() * 3 // 4, 96 << 20)
    budget = limit // 2                                  # headroom for compiler scratch
    # VMEM bytes needed per batch row inside one grid step (in/out blocks double-buffered).
    per_row = 2 * C * X * elem_bytes                     # candidate block
    per_row += 2 * user_rows * X * elem_bytes            # user block ((TB,X) or (TB,C,X))
    per_row += 2 * C * 4                                 # output block
    if hidden:
        per_row += 2 * C * _round_up(max(hidden, 1), 128) * 4   # f32 hidden intermediates
    tb = max(1, budget // max(per_row, 1))
    if B <= 8:
        return B, limit                                  # block == full batch dim
    tb = max(8, min((tb // 8) * 8, _round_up(B, 8)))     # multiple of 8 (sublane aligned)
    # keep >= 2 parallel grid steps so a dual-TensorCore chip (v7x) can shard the batch axis
    tb = min(tb, max(8, _round_up(pl.cdiv(B, 2), 8)))
    return tb, limit


# -------------------- dot_product predictor --------------------
def _dot_bmm_kernel(c_ref, u_ref, o_ref):
    # c: (TB, C, X), u: (TB, X) -> o: (TB, C)    [torch.bmm(cand, user[..., None]).squeeze(-1)]
    tb, x = u_ref.shape
    prod = c_ref[...] * u_ref[...].reshape(tb, 1, x)     # native-dtype VPU multiply (bcast C)
    o_ref[...] = jnp.sum(prod.astype(jnp.float32), axis=-1).astype(o_ref.dtype)


def _dot_sum_kernel(c_ref, u_ref, o_ref):
    # c, u: (TB, C, X) -> o: (TB, C)             [torch.sum(user * cand, dim=-1)]
    prod = c_ref[...] * u_ref[...]                       # native-dtype VPU multiply
    o_ref[...] = jnp.sum(prod.astype(jnp.float32), axis=-1).astype(o_ref.dtype)


def dot_product_predict(candidate, user):
    """candidate: (B, C, X); user: (B, X) [bmm path] or (B, C, X) [sum path] -> (B, C)."""
    B, C, X = candidate.shape
    user_rows = C if user.ndim == 3 else 1
    TB, vmem_limit = _pick_batch_tile(B, C, X, candidate.dtype.itemsize, user_rows=user_rows)
    if user.ndim == 3:
        kernel = _dot_sum_kernel
        user_spec = pl.BlockSpec((TB, C, X), lambda i: (i, 0, 0))
    else:
        kernel = _dot_bmm_kernel
        user_spec = pl.BlockSpec((TB, X), lambda i: (i, 0))
    return pl.pallas_call(
        kernel,
        out_shape=jax.ShapeDtypeStruct((B, C), candidate.dtype),
        grid=(pl.cdiv(B, TB),),
        in_specs=[pl.BlockSpec((TB, C, X), lambda i: (i, 0, 0)), user_spec],
        out_specs=pl.BlockSpec((TB, C), lambda i: (i, 0)),
        compiler_params=pltpu.CompilerParams(
            dimension_semantics=("parallel",), vmem_limit_bytes=vmem_limit),
    )(candidate, user)


# -------------------- dnn predictor --------------------
def _dnn_kernel(c_ref, u_ref, w1c_ref, w1u_ref, b1_ref, w2_ref, b2_ref, o_ref):
    tb, C, X = c_ref.shape
    H = w1c_ref.shape[-1]
    # Linear#1 on concat([cand, user_expanded], -1) == cand @ W1[:X] + user @ W1[X:] + b1.
    # One block-wide MXU matmul instead of TB small ones.
    c_flat = c_ref[...].reshape(tb * C, X)
    h = jnp.dot(c_flat, w1c_ref[...], preferred_element_type=jnp.float32)       # (TB*C, H)
    uh = jnp.dot(u_ref[...], w1u_ref[...], preferred_element_type=jnp.float32)  # (TB, H)
    h = h.reshape(tb, C, H) + uh[:, None, :] + b1_ref[...]                      # (TB, C, H)
    h = jnp.maximum(h, 0.0)                                                     # ReLU
    # Linear#2 (out_features=1) as a block-wide VPU multiply + lane reduce epilogue.
    logits = jnp.sum(h * w2_ref[...], axis=-1) + b2_ref[0, 0]                   # (TB, C)
    o_ref[...] = logits.astype(o_ref.dtype)


def dnn_predict(candidate, user, W1, b1, W2, b2):
    """candidate: (B, C, X); user: (B, X); W1: (2X, H), b1: (H,)/(1, H), W2: (H, 1), b2: (1, 1).
    Returns (B, C)."""
    B, C, X = candidate.shape
    H = W1.shape[1]
    TB, vmem_limit = _pick_batch_tile(B, C, X, candidate.dtype.itemsize, hidden=H)
    W1c = W1[:X].astype(candidate.dtype)            # split => no in-VMEM concat of (cand, user)
    W1u = W1[X:].astype(candidate.dtype)
    b1f = jnp.asarray(b1, jnp.float32).reshape(1, H)
    W2t = jnp.asarray(W2, jnp.float32).reshape(1, H)     # (H, 1) -> (1, H) row for the epilogue
    b2f = jnp.asarray(b2, jnp.float32).reshape(1, 1)
    return pl.pallas_call(
        _dnn_kernel,
        out_shape=jax.ShapeDtypeStruct((B, C), candidate.dtype),
        grid=(pl.cdiv(B, TB),),
        in_specs=[
            pl.BlockSpec((TB, C, X), lambda i: (i, 0, 0)),
            pl.BlockSpec((TB, X), lambda i: (i, 0)),
            pl.BlockSpec((X, H), lambda i: (0, 0)),
            pl.BlockSpec((X, H), lambda i: (0, 0)),
            pl.BlockSpec((1, H), lambda i: (0, 0)),
            pl.BlockSpec((1, H), lambda i: (0, 0)),
            pl.BlockSpec(memory_space=pltpu.MemorySpace.SMEM),   # b2 scalar in SMEM
        ],
        out_specs=pl.BlockSpec((TB, C), lambda i: (i, 0)),
        compiler_params=pltpu.CompilerParams(
            dimension_semantics=("parallel",), vmem_limit_bytes=vmem_limit),
    )(candidate, user, W1c, W1u, b1f, W2t, b2f)


if __name__ == "__main__":
    key = jax.random.PRNGKey(0)
    k1, k2, k3, k4, k5, k6, k7 = jax.random.split(key, 7)

    # ---- small shapes (single grid step), predictor == 'dot_product' (bmm path) ----
    B, C, X = 2, 8, 32
    candidate = jax.random.normal(k1, (B, C, X), jnp.float32)
    user = jax.random.normal(k2, (B, X), jnp.float32)

    prob_dot = jax.block_until_ready(dot_product_predict(candidate, user))
    ref_dot = jnp.einsum("bcx,bx->bc", candidate, user)
    assert prob_dot.shape == (B, C)
    assert jnp.allclose(prob_dot, ref_dot, atol=1e-4, rtol=1e-4)

    # ---- predictor == 'dot_product', 3-D user (elementwise-sum path) ----
    user3d = jax.random.normal(k7, (B, C, X), jnp.float32)
    prob_dot3 = jax.block_until_ready(dot_product_predict(candidate, user3d))
    assert jnp.allclose(prob_dot3, jnp.sum(user3d * candidate, axis=-1), atol=1e-4, rtol=1e-4)

    # ---- predictor == 'dnn' ----
    input_size = 2 * X
    hidden = int(math.sqrt(input_size))                  # default hidden_size
    bound1 = 1.0 / math.sqrt(input_size)                 # torch nn.Linear default init
    W1 = jax.random.uniform(k3, (input_size, hidden), jnp.float32, -bound1, bound1)
    b1 = jax.random.uniform(k4, (1, hidden), jnp.float32, -bound1, bound1)
    bound2 = 1.0 / math.sqrt(hidden)
    W2 = jax.random.uniform(k5, (hidden, 1), jnp.float32, -bound2, bound2)
    b2 = jax.random.uniform(k6, (1, 1), jnp.float32, -bound2, bound2)

    prob_dnn = jax.block_until_ready(dnn_predict(candidate, user, W1, b1, W2, b2))
    user_exp = jnp.broadcast_to(user[:, None, :], (B, C, X))
    cat = jnp.concatenate([candidate, user_exp], axis=-1)           # (B, C, 2X)
    ref_h = jnp.maximum(cat @ W1 + b1[0], 0.0)
    ref_dnn = (ref_h @ W2 + b2[0])[..., 0]                          # (B, C)
    assert prob_dnn.shape == (B, C)
    assert jnp.allclose(prob_dnn, ref_dnn, atol=1e-4, rtol=1e-4)

    # ---- B > 8 with a partial last batch tile (multi-step parallel grid + masked writeback)
    B2, C2, X2 = 20, 12, 128
    cand2 = jax.random.normal(k1, (B2, C2, X2), jnp.float32)
    user2 = jax.random.normal(k2, (B2, X2), jnp.float32)
    prob2 = jax.block_until_ready(dot_product_predict(cand2, user2))
    assert jnp.allclose(prob2, jnp.einsum("bcx,bx->bc", cand2, user2), atol=1e-3, rtol=1e-3)

    in2 = 2 * X2
    h2 = int(math.sqrt(in2))
    W1b = jax.random.uniform(k3, (in2, h2), jnp.float32, -0.05, 0.05)
    b1b = jax.random.uniform(k4, (1, h2), jnp.float32, -0.05, 0.05)
    W2b = jax.random.uniform(k5, (h2, 1), jnp.float32, -0.2, 0.2)
    b2b = jax.random.uniform(k6, (1, 1), jnp.float32, -0.2, 0.2)
    prob_dnn2 = jax.block_until_ready(dnn_predict(cand2, user2, W1b, b1b, W2b, b2b))
    ue2 = jnp.broadcast_to(user2[:, None, :], (B2, C2, X2))
    cat2 = jnp.concatenate([cand2, ue2], axis=-1)
    ref2 = (jnp.maximum(cat2 @ W1b + b1b[0], 0.0) @ W2b + b2b[0])[..., 0]
    assert prob_dnn2.shape == (B2, C2)
    assert jnp.allclose(prob_dnn2, ref2, atol=1e-3, rtol=1e-3)

    # TODO(synk): torch's trailing `.squeeze()` in the dnn branch also drops the candidate dim
    # when C == 1; callers that need that exact shape should squeeze the (B, C) result.
    # TODO(synk): the dnn branch with a 3-D (B, C, X) user_vector is not implemented (the torch
    # module only expands a 2-D user there).
    print("KERNEL_OK")
</pallas_src>

<mosaic_0001>
module attributes {stable_mosaic.version = 11 : i64} {
  func.func @_dot_bmm_kernel(%arg0: i32, %arg1: memref<2x8x32xf32, #tpu.memory_space<vmem>>, %arg2: memref<2x32xf32, #tpu.memory_space<vmem>>, %arg3: memref<2x8xf32, #tpu.memory_space<vmem>>) attributes {dimension_semantics = [#tpu.dimension_semantics<parallel>], iteration_bounds = array<i64: 1>, scalar_prefetch = 0 : i64, scratch_operands = 0 : i64, tpu.core_type = #tpu.core_type<tc>, window_params = [{transform_indices = @transform_0, window_bounds = array<i64: 2, 8, 32>}, {transform_indices = @transform_1, window_bounds = array<i64: 2, 32>}, {transform_indices = @transform_2, window_bounds = array<i64: 2, 8>}]} {
    %c0 = arith.constant 0 : index
    %c0_0 = arith.constant 0 : index
    %c0_1 = arith.constant 0 : index
    %0 = vector.load %arg1[%c0, %c0_0, %c0_1] : memref<2x8x32xf32, #tpu.memory_space<vmem>>, vector<2x8x32xf32>
    %c0_2 = arith.constant 0 : index
    %c0_3 = arith.constant 0 : index
    %1 = vector.load %arg2[%c0_2, %c0_3] : memref<2x32xf32, #tpu.memory_space<vmem>>, vector<2x32xf32>
    %2 = vector.shape_cast %1 : vector<2x32xf32> to vector<2x1x32xf32>
    %3 = vector.broadcast %2 : vector<2x1x32xf32> to vector<2x8x32xf32>
    %4 = arith.mulf %0, %3 : vector<2x8x32xf32>
    %cst = arith.constant dense<0.000000e+00> : vector<2x8xf32>
    %5 = vector.multi_reduction <add>, %4, %cst [2] : vector<2x8x32xf32> to vector<2x8xf32>
    %c0_4 = arith.constant 0 : index
    %c0_5 = arith.constant 0 : index
    %6 = vector.load %arg3[%c0_4, %c0_5] : memref<2x8xf32, #tpu.memory_space<vmem>>, vector<2x8xf32>
    tpu.vector_store %arg3[%c0_4, %c0_5], %5 {strides = array<i32>} : memref<2x8xf32, #tpu.memory_space<vmem>>, vector<2x8xf32>,
    return
  }
  func.func @transform_0(%arg0: i32) -> (i32, i32, i32) {
    %c0_i32 = arith.constant 0 : i32
    %c0_i32_0 = arith.constant 0 : i32
    %c0_i32_1 = arith.constant 0 : i32
    return %arg0, %c0_i32, %c0_i32_0 : i32, i32, i32
  }
  func.func @transform_1(%arg0: i32) -> (i32, i32) {
    %c0_i32 = arith.constant 0 : i32
    %c0_i32_0 = arith.constant 0 : i32
    return %arg0, %c0_i32 : i32, i32
  }
  func.func @transform_2(%arg0: i32) -> (i32, i32) {
    %c0_i32 = arith.constant 0 : i32
    %c0_i32_0 = arith.constant 0 : i32
    return %arg0, %c0_i32 : i32, i32
  }
}

</mosaic_0001>

<llo_original>
// kernel: tpu_custom_call.1
$region0: #{tpu_custom_call.1}
  #allocation0 [shape = 'u32[]', space=smem, size = 0x4, offset = 0x4, fixed_abs, tag = 'smem constant byte address 0x4 - core index']
  #allocation1 [shape = 'u32[72,128]{1,0:T(1,128)}', space=vmem, size = 0x9000, scoped, tag = 'internal scratch']
  %s0 = inlined_call_operand.hbm [shape: f32[2,8,32], index: 0, kind: input, shape index: {}]
  %s1 = inlined_call_operand.hbm [shape: f32[2,32], index: 1, kind: input, shape index: {}]
  %s2 = inlined_call_operand.hbm [shape: f32[2,8], index: 2, kind: output, shape index: {}]
  %s3 = sld [smem:[#allocation0]]
  $region26: #{tpu_custom_call.1} parent=0
    _
  %s5 = ssub.s32 1, %s3
  %s6 = scalar_select 0, %s5, %s3
  $region1: #{tpu_custom_call.1} parent=0
    #allocation2 [shape = 'u8[8192]{0}', space=vmem, size = 0x2000, scoped, tag = 'input window, operand 0, single buffered']
    #allocation3 [shape = 's32[1]{0}', space=sflag, size = 0x4, scoped, tag = 'scoped memory for tpu_custom_call.1']
    #allocation4 [shape = 's32[1]{0}', space=sflag, size = 0x4, scoped, tag = 'scoped memory for tpu_custom_call.1']
    #allocation5 [shape = 'u8[1024]{0}', space=vmem, size = 0x400, scoped, tag = 'input window, operand 1, single buffered']
    #allocation6 [shape = 's32[1]{0}', space=sflag, size = 0x4, scoped, tag = 'scoped memory for tpu_custom_call.1']
    #allocation7 [shape = 'u8[1024]{0}', space=vmem, size = 0x400, scoped, tag = 'output window, operand 0, single buffered']
    %7 = vsyncpa [#allocation3], 0
    %8 = vsyncpa [#allocation6], 0
    %9 = vsyncpa [#allocation4], 0
    // Predicated region
    $region2: #{tpu_custom_call.1} parent=1 // pred_check
      _
    $region3: #{tpu_custom_call.1} parent=1 // pred_check_branch
      %11 = sbr.rel (0) target = $region5
    $region4: #{tpu_custom_call.1} parent=1 // pred_region
      %13 = vsyncadd [#allocation3], 0
      %s14 = sshll.u32 %s0, 4
      %s15 = int_to_ptr.hbm [resolvable:$true] %s14
      %s16 = sshll.u32 [#allocation2], 4
      %s17 = int_to_ptr.vmem [resolvable:$true] %s16
      %22 = dma.hbm_to_vmem [thread:$0]  %s15, 256, %s17, [#allocation3], 128, 128, 8
    $region5: #{tpu_custom_call.1} parent=1 // pred_fallthru
      _
    // Predicated region
    $region6: #{tpu_custom_call.1} parent=1 // pred_check
      _
    $region7: #{tpu_custom_call.1} parent=1 // pred_check_branch
      %24 = sbr.rel (0) target = $region9
    $region8: #{tpu_custom_call.1} parent=1 // pred_region
      %26 = vsyncadd [#allocation6], 0
      %s28 = sshll.u32 %s1, 4
      %s29 = int_to_ptr.hbm [resolvable:$true] %s28
      %s30 = sshll.u32 [#allocation5], 4
      %s31 = int_to_ptr.vmem [resolvable:$true] %s30
      %33 = dma.hbm_to_vmem [thread:$0]  %s29, 32, %s31, [#allocation6]
    $region9: #{tpu_custom_call.1} parent=1 // pred_fallthru
      _
    // Predicated region
    $region10: #{tpu_custom_call.1} parent=1 // pred_check
      _
    $region11: #{tpu_custom_call.1} parent=1 // pred_check_branch
      %35 = sbr.rel (0) target = $region13
    $region12: #{tpu_custom_call.1} parent=1 // pred_region
      %37 = dma.done [#allocation3], 256
    $region13: #{tpu_custom_call.1} parent=1 // pred_fallthru
      _
    // Predicated region
    $region14: #{tpu_custom_call.1} parent=1 // pred_check
      _
    $region15: #{tpu_custom_call.1} parent=1 // pred_check_branch
      %39 = sbr.rel (0) target = $region17
    $region16: #{tpu_custom_call.1} parent=1 // pred_region
      %41 = dma.done [#allocation6], 32
    $region17: #{tpu_custom_call.1} parent=1 // pred_fallthru
      _
    %v42 = vld [vmem:[#allocation2] sm:$0xff]
    %v43 = vld [vmem:[#allocation2 + $0x8] sm:$0xff]
    %v44 = vld [vmem:[#allocation5] sm:$0x3]
    %v46 = vrot.slane %v44, 1
    %v47 = vperm.slane %v44, 0
    %v48 = vperm.slane %v46, 0
    %v51 = vmul.f32 %v42, %v47
    %v52 = vmul.f32 %v43, %v48
    %vm53 = vcmask 261120
    %v54 = vsel %vm53, %v51, 0.0
    %55 = vadd.xlane.f32.xlu0 %v54
    %v56 = vpop.xlane.xlu0 %55
    %v57 = vsel %vm53, %v52, 0.0
    %58 = vadd.xlane.f32.xlu0 %v57
    %v59 = vpop.xlane.xlu0 %58
    %v62 = vlaneseq
    %v63 = vand.u32 %v62, 127
    %v64 = vperm.slane %v56, %v63
    %v65 = vperm.slane %v59, %v63
    %vm66 = vcmask 1041409
    %v67 = vsel %vm66, %v65, %v64
    %vm69 = vcmask 58368
    %70 = vst.msk [vmem:[#allocation7] sm:$0x3] %vm69, %v67
    // Predicated region
    $region18: #{tpu_custom_call.1} parent=1 // pred_check
      _
    $region19: #{tpu_custom_call.1} parent=1 // pred_check_branch
      %72 = sbr.rel (0) target = $region21
    $region20: #{tpu_custom_call.1} parent=1 // pred_region
      %74 = vsyncadd [#allocation4], 0
      %s76 = sshll.u32 [#allocation7], 4
      %s77 = int_to_ptr.vmem [resolvable:$true] %s76
      %s78 = sshll.u32 %s2, 4
      %s79 = int_to_ptr.hbm [resolvable:$true] %s78
      %81 = dma.vmem_to_hbm [thread:$0]  %s77, 32, %s79, [#allocation4]
    $region21: #{tpu_custom_call.1} parent=1 // pred_fallthru
      _
    // Predicated region
    $region22: #{tpu_custom_call.1} parent=1 // pred_check
      _
    $region23: #{tpu_custom_call.1} parent=1 // pred_check_branch
      %83 = sbr.rel (0) target = $region25
    $region24: #{tpu_custom_call.1} parent=1 // pred_region
      %85 = dma.done [#allocation4], 32
    $region25: #{tpu_custom_call.1} parent=1 // pred_fallthru
      _
    %86 = vsyncpa [#allocation3], 1
    %87 = vsyncpa [#allocation6], 1
    %88 = vsyncpa [#allocation4], 1

</llo_original>
